<compile_context>
chip_gen: v7x
topology: tpu7x:2x2x1
jax: 0.10.0
libtpu: 0.0.40
codegen_flags: <defaults>
</compile_context>

<pallas_src>
import functools

import jax
import jax.numpy as jnp
from jax.experimental import pallas as pl
from jax.experimental.pallas import tpu as pltpu


def _roundup(x, m):
    return -(-x // m) * m


def _sublane(itemsize):
    # Packed sublane count for the second-to-last dim of a VMEM tile.
    return {1: 32, 2: 16, 4: 8, 8: 8}.get(itemsize, 8)


def _vmem_capacity_bytes():
    """Physical per-core VMEM, with a conservative fallback (v7x = 64 MiB)."""
    try:
        return int(pltpu.get_tpu_info().vmem_capacity_bytes)
    except Exception:
        return 64 << 20


def _make_kernel(levels, vertical, split_total, split_tile, need_mask):
    levels = tuple(int(L) for L in levels)

    def kernel(x_ref, o_ref, colmax_ref):
        s = pl.program_id(2)
        ns = pl.num_programs(2)

        x = x_ref[...]  # (TC, TH, W) horizontal / (TC, H, TW) vertical
        if jnp.issubdtype(x.dtype, jnp.floating):
            fill = jnp.array(-jnp.inf, x.dtype)
        else:
            fill = jnp.array(jnp.iinfo(x.dtype).min, x.dtype)

        # Axis of the fully-reduced (non-binned) spatial dim inside the block.
        split_axis = 2 if vertical else 1

        if need_mask:
            # Last spatial block may extend past the array; mask padded rows.
            idx = jax.lax.broadcasted_iota(jnp.int32, x.shape, split_axis)
            valid = split_total - s * split_tile
            x = jnp.where(idx < valid, x, fill)

        # Hoisted non-binned reduction: (TC, W) horizontal / (TC, H) vertical.
        part = jnp.max(x, axis=split_axis)

        @pl.when(s == 0)
        def _():
            colmax_ref[...] = part

        @pl.when(s > 0)
        def _():
            colmax_ref[...] = jnp.maximum(colmax_ref[...], part)

        @pl.when(s == ns - 1)
        def _():
            colmax = colmax_ref[...]
            dim = colmax.shape[1]
            lane = jax.lax.broadcasted_iota(jnp.int32, colmax.shape, 1)
            rows = []
            for L in levels:
                for j in range(L):
                    lo = (j * dim) // L
                    hi = ((j + 1) * dim + L - 1) // L  # ceil((j+1)*dim / L)
                    m = (lane >= lo) & (lane < hi)
                    rows.append(jnp.max(jnp.where(m, colmax, fill), axis=-1))
            # Lane-dense combined output: (total_bins, TC), channels on lanes.
            o_ref[...] = jnp.stack(rows, axis=0).astype(o_ref.dtype)

    return kernel


def _plan_tiling(N, C, H, W, itemsize, vertical, vmem_cap):
    """Returns (tc, split_tile, n_split, need_mask).

    Block sizing is padding-aware: footprint of a (tc, d1, d2) block is
    tc * roundup(d1, sublane) * roundup(d2, 128) * itemsize.
    """
    su = _sublane(itemsize)
    # ~40 MiB/block on 128 MiB-VMEM chips, ~21 MiB on v7x (64 MiB). Double
    # buffering keeps this well under the physical cap with headroom.
    budget = min(40 << 20, max(4 << 20, vmem_cap // 3))

    def in_bytes(tc, d1, d2):
        return tc * _roundup(d1, su) * _roundup(d2, 128) * itemsize

    # Channel-tile candidates: C itself, or multiples of 128 that divide C
    # (the output block's last dim is TC, so it must be 128-aligned or full C).
    tc_cands = sorted({C} | {d for d in range(128, C, 128) if C % d == 0},
                      reverse=True)
    fitting = [t for t in tc_cands if in_bytes(t, H, W) <= budget]
    split_total = W if vertical else H

    if fitting:
        tc = fitting[0]
        # Guarantee >= 4 grid steps when possible so both v7x TCs are used.
        if N * (C // tc) < 4:
            for t in fitting:
                if N * (C // t) >= 4:
                    tc = t
                    break
        return tc, split_total, 1, False

    # Spatial-split fallback: even the minimal channel tile exceeds the
    # budget, so also tile the fully-reduced spatial dim.
    tc = tc_cands[-1]
    if not vertical:
        unit = su
        per_row = tc * _roundup(W, 128) * itemsize
        ts = max(unit, (budget // max(per_row, 1)) // unit * unit)
    else:
        unit = 128
        per_col = tc * _roundup(H, su) * itemsize
        ts = max(unit, (budget // max(per_col, 1)) // unit * unit)

    if ts >= split_total:
        # Can't usefully split (tiny split dim, huge other dim): keep full
        # extent; vmem_limit below is clamped at physical VMEM.
        # TODO(synk): pathological shapes here may still exceed physical VMEM.
        return tc, split_total, 1, False

    ns = -(-split_total // ts)
    need_mask = (split_total % ts) != 0
    return tc, ts, ns, need_mask


@functools.partial(jax.jit, static_argnames=("levels", "vertical"))
def temporal_pyramid_maxpool_2d(x, levels, vertical=False):
    levels = tuple(int(L) for L in levels)
    N, C, H, W = x.shape
    total_bins = sum(levels)
    itemsize = jnp.dtype(x.dtype).itemsize
    su = _sublane(itemsize)

    vmem_cap = _vmem_capacity_bytes()
    tc, ts, ns, need_mask = _plan_tiling(N, C, H, W, itemsize, vertical, vmem_cap)

    split_total = W if vertical else H
    kernel = _make_kernel(levels, vertical, split_total, ts, need_mask)

    if not vertical:
        in_spec = pl.BlockSpec((None, tc, ts, W), lambda b, c, s: (b, c, s, 0))
        in_block_pad = tc * _roundup(ts, su) * _roundup(W, 128) * itemsize
        binned = W
    else:
        in_spec = pl.BlockSpec((None, tc, H, ts), lambda b, c, s: (b, c, 0, s))
        in_block_pad = tc * _roundup(H, su) * _roundup(ts, 128) * itemsize
        binned = H

    out_spec = pl.BlockSpec((None, total_bins, tc), lambda b, c, s: (b, 0, c))
    out_shape = jax.ShapeDtypeStruct((N, total_bins, C), x.dtype)
    out_block_pad = _roundup(total_bins, su) * _roundup(tc, 128) * itemsize
    scratch_pad = _roundup(tc, su) * _roundup(binned, 128) * itemsize

    # Double-buffered input + output, plus the colmax scratch, plus margin for
    # compiler-internal scratch. Always passed; capped by physical VMEM.
    need = 2 * in_block_pad + 2 * out_block_pad + scratch_pad
    vmem_limit = int(min(max(vmem_cap - (4 << 20), 16 << 20),
                         max(32 << 20, need + (12 << 20))))

    cost = pl.CostEstimate(
        flops=int(N * C * H * W),  # ~one compare per input element
        transcendentals=0,
        bytes_accessed=int(N * C * H * W * itemsize
                           + N * total_bins * C * itemsize),
    )

    y = pl.pallas_call(
        kernel,
        grid=(N, C // tc, ns),
        in_specs=[in_spec],
        out_specs=out_spec,
        out_shape=out_shape,
        scratch_shapes=[pltpu.VMEM((tc, binned), x.dtype)],
        compiler_params=pltpu.CompilerParams(
            dimension_semantics=("parallel", "parallel", "arbitrary"),
            vmem_limit_bytes=vmem_limit,
        ),
        cost_estimate=cost,
    )(x)  # (N, total_bins, C)

    # Glue (matches torch: y.view(n, c*level) per level, then cat on dim=1).
    parts = []
    off = 0
    for L in levels:
        slab = y[:, off:off + L, :]  # (N, L, C)
        parts.append(jnp.transpose(slab, (0, 2, 1)).reshape(N, C * L))
        off += L
    return jnp.concatenate(parts, axis=1)


def _reference(x, levels, vertical=False):
    """Pure-JAX reference replicating torch adaptive_max_pool2d semantics."""
    N, C, H, W = x.shape
    outs = []
    for L in levels:
        dim = H if vertical else W
        cols = []
        for j in range(L):
            s = (j * dim) // L
            e = ((j + 1) * dim + L - 1) // L
            seg = x[:, :, s:e, :] if vertical else x[:, :, :, s:e]
            cols.append(jnp.max(seg, axis=(2, 3)))
        yl = jnp.stack(cols, axis=-1)  # (N, C, L)
        outs.append(yl.reshape(N, C * L))
    return jnp.concatenate(outs, axis=1)


if __name__ == "__main__":
    key = jax.random.PRNGKey(0)
    N, C, H, W = 2, 4, 16, 16
    levels = (1, 2, 4)

    x = jax.random.normal(key, (N, C, H, W), dtype=jnp.float32)

    # Horizontal (default) pyramid.
    out_h = jax.block_until_ready(
        temporal_pyramid_maxpool_2d(x, levels=levels, vertical=False))
    ref_h = _reference(x, levels, False)
    assert out_h.shape == (N, C * sum(levels)), out_h.shape
    assert jnp.allclose(out_h, ref_h, atol=1e-6, rtol=1e-6), "horizontal mismatch"

    # Vertical pyramid.
    out_v = jax.block_until_ready(
        temporal_pyramid_maxpool_2d(x, levels=levels, vertical=True))
    ref_v = _reference(x, levels, True)
    assert out_v.shape == (N, C * sum(levels)), out_v.shape
    assert jnp.allclose(out_v, ref_v, atol=1e-6, rtol=1e-6), "vertical mismatch"

    print("KERNEL_OK")
</pallas_src>

<mosaic_0001>
module attributes {stable_mosaic.version = 11 : i64} {
  func.func @kernel(%arg0: i32, %arg1: i32, %arg2: i32, %arg3: memref<1x4x16x16xf32, #tpu.memory_space<vmem>>, %arg4: memref<1x7x4xf32, #tpu.memory_space<vmem>>, %arg5: memref<4x16xf32, #tpu.memory_space<vmem>>) attributes {dimension_semantics = [#tpu.dimension_semantics<parallel>, #tpu.dimension_semantics<parallel>, #tpu.dimension_semantics<arbitrary>], iteration_bounds = array<i64: 2, 1, 1>, scalar_prefetch = 0 : i64, scratch_operands = 1 : i64, tpu.core_type = #tpu.core_type<tc>, window_params = [{transform_indices = @transform_0, window_bounds = array<i64: 1, 4, 16, 16>}, {transform_indices = @transform_1, window_bounds = array<i64: 1, 7, 4>}]} {
    %c0 = arith.constant 0 : index
    %c0_0 = arith.constant 0 : index
    %c0_1 = arith.constant 0 : index
    %c0_2 = arith.constant 0 : index
    %0 = vector.load %arg3[%c0, %c0_0, %c0_1, %c0_2] : memref<1x4x16x16xf32, #tpu.memory_space<vmem>>, vector<1x4x16x16xf32>
    %1 = vector.shape_cast %0 : vector<1x4x16x16xf32> to vector<4x16x16xf32>
    %cst = arith.constant dense<0xFF800000> : vector<4x16xf32>
    %2 = vector.multi_reduction <maximumf>, %1, %cst [1] : vector<4x16x16xf32> to vector<4x16xf32>
    %c0_i32 = arith.constant 0 : i32
    %3 = arith.cmpi eq, %arg2, %c0_i32 : i32
    %4 = arith.extui %3 : i1 to i32
    %c0_i32_3 = arith.constant 0 : i32
    %5 = arith.cmpi ne, %4, %c0_i32_3 : i32
    scf.if %5 {
      %c0_9 = arith.constant 0 : index
      %c0_10 = arith.constant 0 : index
      %12 = vector.load %arg5[%c0_9, %c0_10] : memref<4x16xf32, #tpu.memory_space<vmem>>, vector<4x16xf32>
      tpu.vector_store %arg5[%c0_9, %c0_10], %2 {strides = array<i32>} : memref<4x16xf32, #tpu.memory_space<vmem>>, vector<4x16xf32>,
    } else {
    }
    %c0_i32_4 = arith.constant 0 : i32
    %6 = arith.cmpi sgt, %arg2, %c0_i32_4 : i32
    %7 = arith.extui %6 : i1 to i32
    %c0_i32_5 = arith.constant 0 : i32
    %8 = arith.cmpi ne, %7, %c0_i32_5 : i32
    scf.if %8 {
      %c0_9 = arith.constant 0 : index
      %c0_10 = arith.constant 0 : index
      %12 = vector.load %arg5[%c0_9, %c0_10] : memref<4x16xf32, #tpu.memory_space<vmem>>, vector<4x16xf32>
      %13 = arith.maximumf %12, %2 : vector<4x16xf32>
      %c0_11 = arith.constant 0 : index
      %c0_12 = arith.constant 0 : index
      %14 = vector.load %arg5[%c0_11, %c0_12] : memref<4x16xf32, #tpu.memory_space<vmem>>, vector<4x16xf32>
      tpu.vector_store %arg5[%c0_11, %c0_12], %13 {strides = array<i32>} : memref<4x16xf32, #tpu.memory_space<vmem>>, vector<4x16xf32>,
    } else {
    }
    %c0_i32_6 = arith.constant 0 : i32
    %9 = arith.cmpi eq, %arg2, %c0_i32_6 : i32
    %10 = arith.extui %9 : i1 to i32
    %cst_7 = arith.constant 0xFF800000 : f32
    %c0_i32_8 = arith.constant 0 : i32
    %11 = arith.cmpi ne, %10, %c0_i32_8 : i32
    scf.if %11 {
      %c0_9 = arith.constant 0 : index
      %c0_10 = arith.constant 0 : index
      %12 = vector.load %arg5[%c0_9, %c0_10] : memref<4x16xf32, #tpu.memory_space<vmem>>, vector<4x16xf32>
      %13 = tpu.iota {dimensions = array<i32: 1>} : vector<4x16xi32>
      %c0_i32_11 = arith.constant 0 : i32
      %14 = vector.broadcast %c0_i32_11 : i32 to vector<4x16xi32>
      %15 = arith.cmpi sge, %13, %14 : vector<4x16xi32>
      %c16_i32 = arith.constant 16 : i32
      %16 = vector.broadcast %c16_i32 : i32 to vector<4x16xi32>
      %17 = arith.cmpi slt, %13, %16 : vector<4x16xi32>
      %18 = arith.andi %15, %17 : vector<4x16xi1>
      %19 = vector.broadcast %cst_7 : f32 to vector<4x16xf32>
      %20 = arith.select %18, %12, %19 : vector<4x16xi1>, vector<4x16xf32>
      %cst_12 = arith.constant dense<0xFF800000> : vector<4xf32>
      %21 = vector.multi_reduction <maximumf>, %20, %cst_12 [1] : vector<4x16xf32> to vector<4xf32>
      %c0_i32_13 = arith.constant 0 : i32
      %22 = vector.broadcast %c0_i32_13 : i32 to vector<4x16xi32>
      %23 = arith.cmpi sge, %13, %22 : vector<4x16xi32>
      %c8_i32 = arith.constant 8 : i32
      %24 = vector.broadcast %c8_i32 : i32 to vector<4x16xi32>
      %25 = arith.cmpi slt, %13, %24 : vector<4x16xi32>
      %26 = arith.andi %23, %25 : vector<4x16xi1>
      %27 = vector.broadcast %cst_7 : f32 to vector<4x16xf32>
      %28 = arith.select %26, %12, %27 : vector<4x16xi1>, vector<4x16xf32>
      %cst_14 = arith.constant dense<0xFF800000> : vector<4xf32>
      %29 = vector.multi_reduction <maximumf>, %28, %cst_14 [1] : vector<4x16xf32> to vector<4xf32>
      %c8_i32_15 = arith.constant 8 : i32
      %30 = vector.broadcast %c8_i32_15 : i32 to vector<4x16xi32>
      %31 = arith.cmpi sge, %13, %30 : vector<4x16xi32>
      %c16_i32_16 = arith.constant 16 : i32
      %32 = vector.broadcast %c16_i32_16 : i32 to vector<4x16xi32>
      %33 = arith.cmpi slt, %13, %32 : vector<4x16xi32>
      %34 = arith.andi %31, %33 : vector<4x16xi1>
      %35 = vector.broadcast %cst_7 : f32 to vector<4x16xf32>
      %36 = arith.select %34, %12, %35 : vector<4x16xi1>, vector<4x16xf32>
      %cst_17 = arith.constant dense<0xFF800000> : vector<4xf32>
      %37 = vector.multi_reduction <maximumf>, %36, %cst_17 [1] : vector<4x16xf32> to vector<4xf32>
      %c0_i32_18 = arith.constant 0 : i32
      %38 = vector.broadcast %c0_i32_18 : i32 to vector<4x16xi32>
      %39 = arith.cmpi sge, %13, %38 : vector<4x16xi32>
      %c4_i32 = arith.constant 4 : i32
      %40 = vector.broadcast %c4_i32 : i32 to vector<4x16xi32>
      %41 = arith.cmpi slt, %13, %40 : vector<4x16xi32>
      %42 = arith.andi %39, %41 : vector<4x16xi1>
      %43 = vector.broadcast %cst_7 : f32 to vector<4x16xf32>
      %44 = arith.select %42, %12, %43 : vector<4x16xi1>, vector<4x16xf32>
      %cst_19 = arith.constant dense<0xFF800000> : vector<4xf32>
      %45 = vector.multi_reduction <maximumf>, %44, %cst_19 [1] : vector<4x16xf32> to vector<4xf32>
      %c4_i32_20 = arith.constant 4 : i32
      %46 = vector.broadcast %c4_i32_20 : i32 to vector<4x16xi32>
      %47 = arith.cmpi sge, %13, %46 : vector<4x16xi32>
      %c8_i32_21 = arith.constant 8 : i32
      %48 = vector.broadcast %c8_i32_21 : i32 to vector<4x16xi32>
      %49 = arith.cmpi slt, %13, %48 : vector<4x16xi32>
      %50 = arith.andi %47, %49 : vector<4x16xi1>
      %51 = vector.broadcast %cst_7 : f32 to vector<4x16xf32>
      %52 = arith.select %50, %12, %51 : vector<4x16xi1>, vector<4x16xf32>
      %cst_22 = arith.constant dense<0xFF800000> : vector<4xf32>
      %53 = vector.multi_reduction <maximumf>, %52, %cst_22 [1] : vector<4x16xf32> to vector<4xf32>
      %c8_i32_23 = arith.constant 8 : i32
      %54 = vector.broadcast %c8_i32_23 : i32 to vector<4x16xi32>
      %55 = arith.cmpi sge, %13, %54 : vector<4x16xi32>
      %c12_i32 = arith.constant 12 : i32
      %56 = vector.broadcast %c12_i32 : i32 to vector<4x16xi32>
      %57 = arith.cmpi slt, %13, %56 : vector<4x16xi32>
      %58 = arith.andi %55, %57 : vector<4x16xi1>
      %59 = vector.broadcast %cst_7 : f32 to vector<4x16xf32>
      %60 = arith.select %58, %12, %59 : vector<4x16xi1>, vector<4x16xf32>
      %cst_24 = arith.constant dense<0xFF800000> : vector<4xf32>
      %61 = vector.multi_reduction <maximumf>, %60, %cst_24 [1] : vector<4x16xf32> to vector<4xf32>
      %c12_i32_25 = arith.constant 12 : i32
      %62 = vector.broadcast %c12_i32_25 : i32 to vector<4x16xi32>
      %63 = arith.cmpi sge, %13, %62 : vector<4x16xi32>
      %c16_i32_26 = arith.constant 16 : i32
      %64 = vector.broadcast %c16_i32_26 : i32 to vector<4x16xi32>
      %65 = arith.cmpi slt, %13, %64 : vector<4x16xi32>
      %66 = arith.andi %63, %65 : vector<4x16xi1>
      %67 = vector.broadcast %cst_7 : f32 to vector<4x16xf32>
      %68 = arith.select %66, %12, %67 : vector<4x16xi1>, vector<4x16xf32>
      %cst_27 = arith.constant dense<0xFF800000> : vector<4xf32>
      %69 = vector.multi_reduction <maximumf>, %68, %cst_27 [1] : vector<4x16xf32> to vector<4xf32>
      %70 = vector.shape_cast %21 : vector<4xf32> to vector<1x4xf32>
      %71 = vector.shape_cast %29 : vector<4xf32> to vector<1x4xf32>
      %72 = vector.shape_cast %37 : vector<4xf32> to vector<1x4xf32>
      %73 = vector.shape_cast %45 : vector<4xf32> to vector<1x4xf32>
      %74 = vector.shape_cast %53 : vector<4xf32> to vector<1x4xf32>
      %75 = vector.shape_cast %61 : vector<4xf32> to vector<1x4xf32>
      %76 = vector.shape_cast %69 : vector<4xf32> to vector<1x4xf32>
      %77 = tpu.concatenate %70, %71, %72, %73, %74, %75, %76 in 0 : vector<1x4xf32>, vector<1x4xf32>, vector<1x4xf32>, vector<1x4xf32>, vector<1x4xf32>, vector<1x4xf32>, vector<1x4xf32> -> vector<7x4xf32>
      %c0_28 = arith.constant 0 : index
      %c0_29 = arith.constant 0 : index
      %c0_30 = arith.constant 0 : index
      %78 = vector.load %arg4[%c0_28, %c0_29, %c0_30] : memref<1x7x4xf32, #tpu.memory_space<vmem>>, vector<1x7x4xf32>
      %79 = vector.shape_cast %78 : vector<1x7x4xf32> to vector<7x4xf32>
      %80 = vector.shape_cast %77 : vector<7x4xf32> to vector<1x7x4xf32>
      tpu.vector_store %arg4[%c0_28, %c0_29, %c0_30], %80 {strides = array<i32>} : memref<1x7x4xf32, #tpu.memory_space<vmem>>, vector<1x7x4xf32>,
    } else {
    }
    return
  }
  func.func @transform_0(%arg0: i32, %arg1: i32, %arg2: i32) -> (i32, i32, i32, i32) {
    %c0_i32 = arith.constant 0 : i32
    %c0_i32_0 = arith.constant 0 : i32
    return %arg0, %arg1, %arg2, %c0_i32 : i32, i32, i32, i32
  }
  func.func @transform_1(%arg0: i32, %arg1: i32, %arg2: i32) -> (i32, i32, i32) {
    %c0_i32 = arith.constant 0 : i32
    %c0_i32_0 = arith.constant 0 : i32
    return %arg0, %c0_i32, %arg1 : i32, i32, i32
  }
}

</mosaic_0001>

<llo_original>
// kernel: temporal_pyramid_maxpool_2d.1
$region0: #{temporal_pyramid_maxpool_2d.1}
  #allocation0 [shape = 'u32[]', space=smem, size = 0x4, offset = 0x4, fixed_abs, tag = 'smem constant byte address 0x4 - core index']
  #allocation1 [shape = 'u32[144,128]{1,0:T(1,128)}', space=vmem, size = 0x12000, scoped, tag = 'internal scratch']
  #allocation2 [shape = 'f32[4,16]{1,0:T(4,128)}', space=vmem, size = 0x800, scoped, tag = 'scratch operand']
  %s0 = inlined_call_operand.hbm [shape: f32[2,4,16,16], index: 0, kind: input, shape index: {}]
  %s1 = inlined_call_operand.vmem [shape: f32[2,7,4], index: 1, kind: output, shape index: {}]
  %s2 = sld [smem:[#allocation0]]
  $region53: #{temporal_pyramid_maxpool_2d.1} parent=0
    _
  %s4 = ssub.s32 1, %s2
  %s5 = scalar_select 0, %s4, %s2
  $region1: #{temporal_pyramid_maxpool_2d.1} parent=0
    #allocation3 [shape = 'u8[65536]{0}', space=vmem, size = 0x10000, scoped, tag = 'input window, operand 0']
    #allocation4 [shape = 's32[2]{0}', space=sflag, size = 0x8, scoped, tag = 'scoped memory for temporal_pyramid_maxpool_2d.1']
    %6 = vsyncpa [#allocation4], 0
    %s7 = scalar_lea.sflag [#allocation4], 1
    %8 = vsyncpa %s7, 0
    loop: start=0, step=1, limit=4
    $region2: #{temporal_pyramid_maxpool_2d.1} parent=1 // loop_pre_header
      _
    $region3: #{temporal_pyramid_maxpool_2d.1} parent=1 // loop_header
      %s10 = sphi 0, %s14
      %p11 = scmp.ge.s32.totalorder %s10, 4
      %s17 = sphi 0, %s36
      %s18 = sphi 0, %s32
      %s19 = sphi 0, %s28
      %s20 = sphi 0, %s17
      %s21 = sphi 0, %s18
      %s22 = sphi 0, %s19
      %s23 = sphi 0, %s20
      %s24 = sphi 0, %s21
      %s25 = sphi 0, %s22
      %s43 = sphi 0, %s45
      %s46 = sphi 0, %s43
      %s47 = sphi 0, %s46
      %s63 = sphi 0, %s47
      %s71 = sphi 0, %s73
      %s74 = sphi 0, %s71
      %s75 = sphi 0, %s74
      %s91 = sphi 0, %s75
    $region4: #{temporal_pyramid_maxpool_2d.1} parent=1 // loop_header_branch
      %13 = sbr.rel (%p11) target = $region8
    $region5: #{temporal_pyramid_maxpool_2d.1} parent=1 // loop_body
      %s15 = ssub.s32 %s10, 1
      %s16 = ssub.s32 %s10, 2
      %s26 = sadd.s32 1, %s19
      %p27 = scmp.ge.s32.totalorder %s26, 1
      %s28 = scalar_select %p27, 0, %s26
      %s29 = sadd.s32 1, %s18
      %s30 = scalar_select %p27, %s29, %s18
      %p31 = scmp.ge.s32.totalorder %s30, 1
      %s32 = scalar_select %p31, 0, %s30
      %s33 = sadd.s32 1, %s17
      %s34 = scalar_select %p31, %s33, %s17
      %p35 = scmp.ge.s32.totalorder %s34, 2
      %s36 = scalar_select %p35, 0, %s34
      %s37 = ssub.s32 %s17, %s36
      %s38 = ssub.s32 %s18, %s32
      %s39 = sor.u32 %s37, %s38
      %s40 = ssub.s32 %s19, %s28
      %s41 = sor.u32 %s39, %s40
      %p42 = scmp.eq.s32.totalorder %s41, 0
      %s44 = sadd.s32 %s43, 1
      %s45 = scalar_select %p42, %s43, %s44
      %p48 = pneg %p42
      %p49 = scmp.eq.s32.totalorder %s10, 1
      %p50 = por %p48, %p49
      %p51 = scmp.ne.s32.totalorder %s43, %s46
      %p52 = scmp.eq.s32.totalorder %s10, 0
      %p53 = por %p51, %p52
      %p54 = scmp.ne.s32.totalorder %s43, %s46
      %p55 = scmp.eq.s32.totalorder %s15, 1
      %p56 = por %p54, %p55
      %p57 = scmp.ne.s32.totalorder %s46, %s47
      %p58 = scmp.eq.s32.totalorder %s15, 0
      %p59 = por %p57, %p58
      %p60 = scmp.ne.s32.totalorder %s46, %s47
      %p61 = scmp.eq.s32.totalorder %s16, 1
      %p62 = por %p60, %p61
      %p64 = scmp.ne.s32.totalorder %s47, %s63
      %p65 = scmp.eq.s32.totalorder %s16, 0
      %p66 = por %p64, %p65
      %s67 = ssub.s32 %s17, %s36
      %s68 = ssub.s32 %s18, %s32
      %s69 = sor.u32 %s67, %s68
      %p70 = scmp.eq.s32.totalorder %s69, 0
      %s72 = sadd.s32 %s71, 1
      %s73 = scalar_select %p70, %s71, %s72
      %p76 = pneg %p70
      %p77 = scmp.eq.s32.totalorder %s10, 1
      %p78 = por %p76, %p77
      %p79 = scmp.ne.s32.totalorder %s71, %s74
      %p80 = scmp.eq.s32.totalorder %s10, 0
      %p81 = por %p79, %p80
      %p82 = scmp.ne.s32.totalorder %s71, %s74
      %p83 = scmp.eq.s32.totalorder %s15, 1
      %p84 = por %p82, %p83
      %p85 = scmp.ne.s32.totalorder %s74, %s75
      %p86 = scmp.eq.s32.totalorder %s15, 0
      %p87 = por %p85, %p86
      %p88 = scmp.ne.s32.totalorder %s74, %s75
      %p89 = scmp.eq.s32.totalorder %s16, 1
      %p90 = por %p88, %p89
      %p92 = scmp.ne.s32.totalorder %s75, %s91
      %p93 = scmp.eq.s32.totalorder %s16, 0
      %p94 = por %p92, %p93
      %p95 = scmp.le.s32.totalorder 1, %s10
      %p96 = scmp.lt.s32.totalorder %s10, 3
      %p97 = pnand %p95, %p96
      %p98 = pneg %p97
      // Predicated region
      $region9: #{temporal_pyramid_maxpool_2d.1} parent=5 // pred_check
        _
      $region10: #{temporal_pyramid_maxpool_2d.1} parent=5 // pred_check_branch
        %100 = sbr.rel (%p97) target = $region12
      $region11: #{temporal_pyramid_maxpool_2d.1} parent=5 // pred_region
        %s101 = ssub.s32 %s10, 1
      $region12: #{temporal_pyramid_maxpool_2d.1} parent=5 // pred_fallthru
        _
      %p102 = scmp.lt.s32.totalorder %s10, 2
      // Predicated region
      $region13: #{temporal_pyramid_maxpool_2d.1} parent=5 // pred_check
        %p103 = pneg %p102
      $region14: #{temporal_pyramid_maxpool_2d.1} parent=5 // pred_check_branch
        %105 = sbr.rel (%p103) target = $region16
      $region15: #{temporal_pyramid_maxpool_2d.1} parent=5 // pred_region
        // Predicated region
        $region17: #{temporal_pyramid_maxpool_2d.1} parent=15 // pred_check
          %p106 = pneg %p53
        $region18: #{temporal_pyramid_maxpool_2d.1} parent=15 // pred_check_branch
          %108 = sbr.rel (%p106) target = $region20
        $region19: #{temporal_pyramid_maxpool_2d.1} parent=15 // pred_region
          %s109 = sand.u32 %s43, 1
          %s110 = scalar_lea.sflag [#allocation4], %s109
          %s111 = sand.u32 %s43, 1
          %s112 = smul.addr %s111, 64
          %s113 = scalar_lea.vmem [#allocation3], %s112
          %s114 = smul.u32 4, %s18
          %s115 = smul.u32 2, %s19
          %s117 = ssub.s32 1024, 1024
          %118 = vsyncadd %s110, %s117
          %s119 = smul.addr %s114, 2
          %s120 = sadd.s32 %s115, %s119
          %s121 = smul.addr %s17, 8
          %s122 = sadd.s32 %s120, %s121
          %s123 = smul.addr %s122, 128
          %s124 = scalar_lea.hbm %s0, %s123
          %s125 = sshll.u32 %s113, 4
          %s126 = int_to_ptr.vmem [resolvable:$true] %s125
          %131 = dma.hbm_to_vmem [thread:$0]  %s124, 1024, %s126, %s110, 128, 128, 8
        $region20: #{temporal_pyramid_maxpool_2d.1} parent=15 // pred_fallthru
          _
      $region16: #{temporal_pyramid_maxpool_2d.1} parent=5 // pred_fallthru
        _
      %p132 = scmp.le.s32.totalorder 1, %s10
      %p133 = scmp.lt.s32.totalorder %s10, 3
      %p134 = pnand %p132, %p133
      %p135 = pneg %p134
      // Predicated region
      $region21: #{temporal_pyramid_maxpool_2d.1} parent=5 // pred_check
        _
      $region22: #{temporal_pyramid_maxpool_2d.1} parent=5 // pred_check_branch
        %137 = sbr.rel (%p134) target = $region24
      $region23: #{temporal_pyramid_maxpool_2d.1} parent=5 // pred_region
        %s138 = ssub.s32 %s10, 1
        %s139 = sand.u32 %s46, 1
        %s140 = scalar_lea.sflag [#allocation4], %s139
        %s141 = sand.u32 %s46, 1
        %s142 = smul.addr %s141, 64
        %s143 = scalar_lea.vmem [#allocation3], %s142
        // Predicated region
        $region25: #{temporal_pyramid_maxpool_2d.1} parent=23 // pred_check
          %p144 = pneg %p59
        $region26: #{temporal_pyramid_maxpool_2d.1} parent=23 // pred_check_branch
          %146 = sbr.rel (%p144) target = $region28
        $region27: #{temporal_pyramid_maxpool_2d.1} parent=23 // pred_region
          %147 = dma.done %s140, 1024
        $region28: #{temporal_pyramid_maxpool_2d.1} parent=23 // pred_fallthru
          _
        %s148 = sand.u32 %s46, 1
        %s149 = scalar_lea.sflag [#allocation4], %s148
        %s150 = sand.u32 %s46, 1
        %s151 = smul.addr %s150, 64
        %s152 = scalar_lea.vmem [#allocation3], %s151
        %p153 = pneg %p59
        %p154 = pneg %p56
        %p155 = pneg %p87
        %p156 = pneg %p84
        %p157 = scmp.lt.s32.totalorder %s20, 1
        %s158 = scalar_select %p157, %s20, 1
        %p159 = scmp.lt.s32.totalorder %s21, 0
        %s160 = scalar_select %p159, %s21, 0
        %s161 = sadd.s32 %s160, %s158
        %s162 = smul.addr %s161, 8
        %s163 = scalar_lea.vmem %s1, %s162
        %s164 = smul.u32 4, %s21
        %s165 = smul.u32 2, %s22
        %p166 = scmp.lt.s32.totalorder %s20, 1
        %s167 = scalar_select %p166, %s20, 1
        %p168 = scmp.lt.s32.totalorder %s21, 0
        %s169 = scalar_select %p168, %s21, 0
        %s170 = sadd.s32 %s169, %s167
        %s171 = smul.addr %s170, 8
        %s172 = scalar_lea.vmem %s1, %s171
        %v173 = vld [vmem:[%s143] sm:$0xff]
        %v174 = vld [vmem:[%s143 + $0x8] sm:$0xff]
        %v175 = vld [vmem:[%s143 + $0x10] sm:$0xff]
        %v176 = vld [vmem:[%s143 + $0x18] sm:$0xff]
        %v177 = vld [vmem:[%s143 + $0x20] sm:$0xff]
        %v178 = vld [vmem:[%s143 + $0x28] sm:$0xff]
        %v179 = vld [vmem:[%s143 + $0x30] sm:$0xff]
        %v180 = vld [vmem:[%s143 + $0x38] sm:$0xff]
        %vm181 = vcmask 130048
        %v182 = vsel %vm181, %v173, -inf
        %v183 = vsel %vm181, %v174, -inf
        %v184 = vmax.f32 %v182, %v183
        %v185 = vrot.slane %v184, 4
        %v186 = vmax.f32 %v184, %v185
        %v187 = vrot.slane %v186, 2
        %v188 = vmax.f32 %v186, %v187
        %v189 = vrot.slane %v188, 1
        %v190 = vmax.f32 %v188, %v189
        %v191 = vsel %vm181, %v175, -inf
        %v192 = vsel %vm181, %v176, -inf
        %v193 = vmax.f32 %v191, %v192
        %v194 = vrot.slane %v193, 4
        %v195 = vmax.f32 %v193, %v194
        %v196 = vrot.slane %v195, 2
        %v197 = vmax.f32 %v195, %v196
        %v198 = vrot.slane %v197, 1
        %v199 = vmax.f32 %v197, %v198
        %v200 = vsel %vm181, %v177, -inf
        %v201 = vsel %vm181, %v178, -inf
        %v202 = vmax.f32 %v200, %v201
        %v203 = vrot.slane %v202, 4
        %v204 = vmax.f32 %v202, %v203
        %v205 = vrot.slane %v204, 2
        %v206 = vmax.f32 %v204, %v205
        %v207 = vrot.slane %v206, 1
        %v208 = vmax.f32 %v206, %v207
        %v209 = vsel %vm181, %v179, -inf
        %v210 = vsel %vm181, %v180, -inf
        %v211 = vmax.f32 %v209, %v210
        %v212 = vrot.slane %v211, 4
        %v213 = vmax.f32 %v211, %v212
        %v214 = vrot.slane %v213, 2
        %v215 = vmax.f32 %v213, %v214
        %v216 = vrot.slane %v215, 1
        %v217 = vmax.f32 %v215, %v216
        %p218 = scmp.eq.s32.totalorder %s22, 0
        // Predicated region
        $region29: #{temporal_pyramid_maxpool_2d.1} parent=23 // pred_check
          %p219 = pneg %p218
        $region30: #{temporal_pyramid_maxpool_2d.1} parent=23 // pred_check_branch
          %221 = sbr.rel (%p219) target = $region32
        $region31: #{temporal_pyramid_maxpool_2d.1} parent=23 // pred_region
          %vm226 = vcmask 1041409
          %v227 = vsel %vm226, %v199, %v190
          %vm228 = vcmask 1042434
          %v229 = vsel %vm228, %v208, %v227
          %vm230 = vcmask 1043459
          %v231 = vsel %vm230, %v217, %v229
          %vm233 = vcmask 125952
          %234 = vst.msk [vmem:[#allocation2] sm:$0xf] %vm233, %v231
        $region32: #{temporal_pyramid_maxpool_2d.1} parent=23 // pred_fallthru
          _
        %p235 = scmp.gt.s32.totalorder %s22, 0
        // Predicated region
        $region33: #{temporal_pyramid_maxpool_2d.1} parent=23 // pred_check
          %p236 = pneg %p235
        $region34: #{temporal_pyramid_maxpool_2d.1} parent=23 // pred_check_branch
          %238 = sbr.rel (%p236) target = $region36
        $region35: #{temporal_pyramid_maxpool_2d.1} parent=23 // pred_region
          %v239 = vld [vmem:[#allocation2] sm:$0xf]
          %vm244 = vcmask 1041409
          %v245 = vsel %vm244, %v199, %v190
          %vm246 = vcmask 1042434
          %v247 = vsel %vm246, %v208, %v245
          %vm248 = vcmask 1043459
          %v249 = vsel %vm248, %v217, %v247
          %v251 = vmax.f32 %v239, %v249
          %vm252 = vcmask 125952
          %253 = vst.msk [vmem:[#allocation2] sm:$0xf] %vm252, %v251
        $region36: #{temporal_pyramid_maxpool_2d.1} parent=23 // pred_fallthru
          _
        // Predicated region
        $region37: #{temporal_pyramid_maxpool_2d.1} parent=23 // pred_check
          %p254 = pneg %p218
        $region38: #{temporal_pyramid_maxpool_2d.1} parent=23 // pred_check_branch
          %256 = sbr.rel (%p254) target = $region40
        $region39: #{temporal_pyramid_maxpool_2d.1} parent=23 // pred_region
          %v257 = vld [vmem:[#allocation2] sm:$0xf]
          %v258 = vlaneseq
          %v259 = vand.u32 %v258, 127
          %vm260 = vcmp.ge.s32.totalorder %v259, 0
          %vm261 = vcmp.lt.s32.totalorder %v259, 16
          %vm262 = vmand %vm260, %vm261
          %v263 = vsel %vm262, %v257, -inf
          %vm264 = vcmask 125952
          %v265 = vsel %vm264, %v263, -inf
          %266 = vmax.xlane.f32.xlu0 %v265
          %v267 = vpop.xlane.xlu0 %266
          %vm268 = vcmp.lt.s32.totalorder %v259, 8
          %vm269 = vmand %vm260, %vm268
          %v270 = vsel %vm269, %v257, -inf
          %v271 = vsel %vm264, %v270, -inf
          %272 = vmax.xlane.f32.xlu0 %v271
          %v273 = vpop.xlane.xlu0 %272
          %vm274 = vcmp.ge.s32.totalorder %v259, 8
          %vm275 = vmand %vm274, %vm261
          %v276 = vsel %vm275, %v257, -inf
          %v277 = vsel %vm264, %v276, -inf
          %278 = vmax.xlane.f32.xlu0 %v277
          %v279 = vpop.xlane.xlu0 %278
          %vm280 = vcmp.lt.s32.totalorder %v259, 4
          %vm281 = vmand %vm260, %vm280
          %v282 = vsel %vm281, %v257, -inf
          %v283 = vsel %vm264, %v282, -inf
          %284 = vmax.xlane.f32.xlu0 %v283
          %v285 = vpop.xlane.xlu0 %284
          %vm286 = vcmp.ge.s32.totalorder %v259, 4
          %vm287 = vmand %vm286, %vm268
          %v288 = vsel %vm287, %v257, -inf
          %v289 = vsel %vm264, %v288, -inf
          %290 = vmax.xlane.f32.xlu0 %v289
          %v291 = vpop.xlane.xlu0 %290
          %vm292 = vcmp.lt.s32.totalorder %v259, 12
          %vm293 = vmand %vm274, %vm292
          %v294 = vsel %vm293, %v257, -inf
          %v295 = vsel %vm264, %v294, -inf
          %296 = vmax.xlane.f32.xlu0 %v295
          %v297 = vpop.xlane.xlu0 %296
          %vm298 = vcmp.ge.s32.totalorder %v259, 12
          %vm299 = vmand %vm298, %vm261
          %v300 = vsel %vm299, %v257, -inf
          %v301 = vsel %vm264, %v300, -inf
          %302 = vmax.xlane.f32.xlu0 %v301
          %v303 = vpop.xlane.xlu0 %302
          %v305 = vlaneseq
          %v306 = vshrl.u32 %v305, 7
          %v307 = vsub.s32 %v259, %v306
          %v308 = vrot.slane %v267, %v307
          %v311 = vlaneseq
          %v312 = vshrl.u32 %v311, 7
          %v313 = vsub.s32 %v259, %v312
          %v314 = vrot.slane %v273, %v313
          %v317 = vlaneseq
          %v318 = vshrl.u32 %v317, 7
          %v319 = vsub.s32 %v259, %v318
          %v320 = vrot.slane %v279, %v319
          %v323 = vlaneseq
          %v324 = vshrl.u32 %v323, 7
          %v325 = vsub.s32 %v259, %v324
          %v326 = vrot.slane %v285, %v325
          %v329 = vlaneseq
          %v330 = vshrl.u32 %v329, 7
          %v331 = vsub.s32 %v259, %v330
          %v332 = vrot.slane %v291, %v331
          %v335 = vlaneseq
          %v336 = vshrl.u32 %v335, 7
          %v337 = vsub.s32 %v259, %v336
          %v338 = vrot.slane %v297, %v337
          %v341 = vlaneseq
          %v342 = vshrl.u32 %v341, 7
          %v343 = vsub.s32 %v259, %v342
          %v344 = vrot.slane %v303, %v343
          %vm346 = vcmask 1040384
          %v347 = vsel %vm346, %v308, %v314
          %vm348 = vcmask 1041408
          %v349 = vsel %vm348, %v347, %v320
          %vm350 = vcmask 1042432
          %v351 = vsel %vm350, %v349, %v326
          %vm352 = vcmask 1043456
          %v353 = vsel %vm352, %v351, %v332
          %vm354 = vcmask 1044480
          %v355 = vsel %vm354, %v353, %v338
          %vm356 = vcmask 1045504
          %v357 = vsel %vm356, %v355, %v344
          %vm358 = vcmask 30720
          %359 = vst.msk [vmem:[%s172] sm:$0x7f] %vm358, %v357
        $region40: #{temporal_pyramid_maxpool_2d.1} parent=23 // pred_fallthru
          _
        %p360 = scmp.lt.s32.totalorder %s20, 1
        %s361 = scalar_select %p360, %s20, 1
        %p362 = scmp.lt.s32.totalorder %s21, 0
        %s363 = scalar_select %p362, %s21, 0
        %s364 = sadd.s32 %s363, %s361
        %s365 = smul.addr %s364, 8
        %s366 = scalar_lea.vmem %s1, %s365
        // Predicated region
        $region41: #{temporal_pyramid_maxpool_2d.1} parent=23 // pred_check
          %p367 = pneg %p84
        $region42: #{temporal_pyramid_maxpool_2d.1} parent=23 // pred_check_branch
          %369 = sbr.rel (%p367) target = $region44
        $region43: #{temporal_pyramid_maxpool_2d.1} parent=23 // pred_region
          _
        $region44: #{temporal_pyramid_maxpool_2d.1} parent=23 // pred_fallthru
          _
      $region24: #{temporal_pyramid_maxpool_2d.1} parent=5 // pred_fallthru
        _
      %p370 = scmp.le.s32.totalorder 2, %s10
      // Predicated region
      $region45: #{temporal_pyramid_maxpool_2d.1} parent=5 // pred_check
        %p371 = pneg %p370
      $region46: #{temporal_pyramid_maxpool_2d.1} parent=5 // pred_check_branch
        %373 = sbr.rel (%p371) target = $region48
      $region47: #{temporal_pyramid_maxpool_2d.1} parent=5 // pred_region
        %s374 = ssub.s32 %s10, 2
        // Predicated region
        $region49: #{temporal_pyramid_maxpool_2d.1} parent=47 // pred_check
          %p375 = pneg %p90
        $region50: #{temporal_pyramid_maxpool_2d.1} parent=47 // pred_check_branch
          %377 = sbr.rel (%p375) target = $region52
        $region51: #{temporal_pyramid_maxpool_2d.1} parent=47 // pred_region
          %p378 = scmp.lt.s32.totalorder %s23, 1
          %s379 = scalar_select %p378, %s23, 1
          %p380 = scmp.lt.s32.totalorder %s24, 0
          %s381 = scalar_select %p380, %s24, 0
          %s382 = sadd.s32 %s381, %s379
          %s383 = smul.addr %s382, 8
          %s384 = scalar_lea.vmem %s1, %s383
        $region52: #{temporal_pyramid_maxpool_2d.1} parent=47 // pred_fallthru
          _
      $region48: #{temporal_pyramid_maxpool_2d.1} parent=5 // pred_fallthru
        _
    $region6: #{temporal_pyramid_maxpool_2d.1} parent=1 // loop_footer
      %s14 = sadd.s32 1, %s10
    $region7: #{temporal_pyramid_maxpool_2d.1} parent=1 // loop_footer_branch
      %9 = sbr.rel target = $region3
    $region8: #{temporal_pyramid_maxpool_2d.1} parent=1 // loop_exit
      _
    %385 = vsyncpa [#allocation4], 1
    %s386 = scalar_lea.sflag [#allocation4], 1
    %387 = vsyncpa %s386, 1

</llo_original>
